<compile_context>
chip_gen: v7x
topology: tpu7x:2x2x1
jax: 0.10.0
libtpu: 0.0.40
codegen_flags: <defaults>
</compile_context>

<pallas_src>
import functools
import math

import jax
import jax.numpy as jnp
from jax.experimental import pallas as pl
from jax.experimental.pallas import tpu as pltpu

K_PAD = 8                      # input dim (+ ones column for bias fold), padded to 8
H_PAD = 128                    # hidden width (40) padded to one full lane group
DOUT_STORE = 8                 # stored output width: d_out padded to 8 lanes
P_ROWS = K_PAD + H_PAD + 8     # blob rows; last 8-row section holds b2 in its row 0
TB_MAX = 512                   # max batch rows per grid step


def _slp_kernel(x_ref, p_ref, out_ref):
    # ---- layer 1 on the MXU (ones-column bias fold) ----
    # x_ref carries 1.0 in column d_in; blob row d_in of the first section is b1,
    # so one dot yields x @ W1 + b1 directly.
    x8 = x_ref[...]                                    # (TB, K_PAD) f32
    s1 = p_ref[0:K_PAD, :]                             # (K_PAD, H_PAD): W1 rows + b1 row
    h = jnp.maximum(
        jnp.dot(x8, s1, preferred_element_type=jnp.float32), 0.0)   # (TB, H_PAD) f32

    # ---- layer 2 on the MXU, bf16 inputs / f32 accumulation ----
    w2 = p_ref[K_PAD:K_PAD + H_PAD, :]                 # (H_PAD, H_PAD), zero-padded cols
    o = jnp.dot(h.astype(jnp.bfloat16), w2.astype(jnp.bfloat16),
                preferred_element_type=jnp.float32)    # (TB, H_PAD) f32
    b2 = p_ref[K_PAD + H_PAD:K_PAD + H_PAD + 1, 0:DOUT_STORE]        # (1, DOUT_STORE)
    out_ref[...] = (o[:, 0:DOUT_STORE] + b2).astype(out_ref.dtype)   # (TB, DOUT_STORE)


def pack_params(w1, b1, w2, b2):
    """Pack W1 (d_in,H), b1 (H,), W2 (H,d_out), b2 (d_out,) into one f32 blob."""
    d_in, h = w1.shape
    d_out = w2.shape[1]
    assert d_in + 1 <= K_PAD and h <= H_PAD and d_out <= DOUT_STORE
    blob = jnp.zeros((P_ROWS, H_PAD), jnp.float32)
    blob = blob.at[:d_in, :h].set(w1.astype(jnp.float32))
    blob = blob.at[d_in, :h].set(b1.reshape(-1).astype(jnp.float32))   # bias-fold row
    blob = blob.at[K_PAD:K_PAD + h, :d_out].set(w2.astype(jnp.float32))
    blob = blob.at[K_PAD + H_PAD, :d_out].set(b2.reshape(-1).astype(jnp.float32))
    return blob


def _choose_tiling(B):
    """Return (B_pad, TB) with B_pad % TB == 0 and TB % 8 == 0."""
    B8 = -(-B // 8) * 8
    if 256 <= B8 <= 2 * TB_MAX and B8 % 16 == 0:
        # Two grid steps: keeps both v7x TensorCores busy; on single-TC chips
        # the one extra step costs only ~600 cycles.
        return B8, B8 // 2
    if B8 <= TB_MAX:
        # Tiny batch: single step (the grid is a sequential loop on v5e/v6e).
        return B8, B8
    B_pad = -(-B // TB_MAX) * TB_MAX
    return B_pad, TB_MAX


@functools.partial(jax.jit, static_argnums=(2, 3))
def slp_forward(x, params, d_in, d_out):
    """x: (B, d_in) f32; params: (P_ROWS, H_PAD) blob from pack_params."""
    B = x.shape[0]
    B_pad, tb = _choose_tiling(B)
    # Pad activations to (B_pad, K_PAD) and fold the layer-1 bias: column d_in = 1.0.
    x8 = jnp.zeros((B_pad, K_PAD), jnp.float32)
    x8 = x8.at[:B, :d_in].set(x.astype(jnp.float32))
    x8 = x8.at[:, d_in].set(1.0)

    out = pl.pallas_call(
        _slp_kernel,
        out_shape=jax.ShapeDtypeStruct((B_pad, DOUT_STORE), jnp.float32),
        grid=(B_pad // tb,),
        in_specs=[
            pl.BlockSpec((tb, K_PAD), lambda i: (i, 0)),       # activations: batch-tiled
            pl.BlockSpec((P_ROWS, H_PAD), lambda i: (0, 0)),   # params: VMEM-resident
        ],
        out_specs=pl.BlockSpec((tb, DOUT_STORE), lambda i: (i, 0)),
        compiler_params=pltpu.CompilerParams(
            dimension_semantics=("parallel",)),                # shard batch across TCs
    )(x8, params)
    return out[:B, :d_out]


def init_slp_params(key, input_dim, output_dim, n_neurons=40):
    """torch.nn.Linear-style U(-1/sqrt(fan_in), 1/sqrt(fan_in)) init (pre-transposed)."""
    k1, k2, k3, k4 = jax.random.split(key, 4)
    b1_bound = 1.0 / math.sqrt(input_dim)
    b2_bound = 1.0 / math.sqrt(n_neurons)
    w1 = jax.random.uniform(k1, (input_dim, n_neurons), jnp.float32, -b1_bound, b1_bound)
    b1 = jax.random.uniform(k2, (n_neurons,), jnp.float32, -b1_bound, b1_bound)
    w2 = jax.random.uniform(k3, (n_neurons, output_dim), jnp.float32, -b2_bound, b2_bound)
    b2 = jax.random.uniform(k4, (output_dim,), jnp.float32, -b2_bound, b2_bound)
    return w1, b1, w2, b2


if __name__ == "__main__":
    # Cartpole-like shapes: obs dim 4, hidden 40, 2 actions; 256 forward passes
    # batched per pallas_call (amortizes launch/DMA overhead across rollout steps).
    D_IN, N_NEURONS, D_OUT = 4, 40, 2
    B = 256

    key = jax.random.PRNGKey(0)
    k_x, k_p = jax.random.split(key)
    x = jax.random.normal(k_x, (B, D_IN), jnp.float32)
    w1, b1, w2, b2 = init_slp_params(k_p, D_IN, D_OUT, N_NEURONS)
    params = pack_params(w1, b1, w2, b2)   # pack once; reuse across rollout steps

    out = jax.block_until_ready(slp_forward(x, params, D_IN, D_OUT))

    # Pure-JAX f32 reference; tolerance loosened for the bf16 layer-2 dot.
    ref = jnp.maximum(x @ w1 + b1, 0.0) @ w2 + b2
    assert out.shape == (B, D_OUT)
    assert jnp.allclose(out, ref, atol=2e-2, rtol=2e-2), float(jnp.max(jnp.abs(out - ref)))

    print("KERNEL_OK")
</pallas_src>

<mosaic_0001>
module attributes {stable_mosaic.version = 11 : i64} {
  func.func @_slp_kernel(%arg0: i32, %arg1: memref<128x8xf32, #tpu.memory_space<vmem>>, %arg2: memref<144x128xf32, #tpu.memory_space<vmem>>, %arg3: memref<128x8xf32, #tpu.memory_space<vmem>>) attributes {dimension_semantics = [#tpu.dimension_semantics<parallel>], iteration_bounds = array<i64: 2>, scalar_prefetch = 0 : i64, scratch_operands = 0 : i64, tpu.core_type = #tpu.core_type<tc>, window_params = [{transform_indices = @transform_0, window_bounds = array<i64: 128, 8>}, {pipeline_mode = #tpu.pipeline_mode<synchronous>, transform_indices = @transform_1, window_bounds = array<i64: 144, 128>}, {transform_indices = @transform_2, window_bounds = array<i64: 128, 8>}]} {
    %c0 = arith.constant 0 : index
    %c0_0 = arith.constant 0 : index
    %0 = vector.load %arg1[%c0, %c0_0] : memref<128x8xf32, #tpu.memory_space<vmem>>, vector<128x8xf32>
    %c0_1 = arith.constant 0 : index
    %c0_2 = arith.constant 0 : index
    %1 = vector.load %arg2[%c0_1, %c0_2] : memref<144x128xf32, #tpu.memory_space<vmem>>, vector<8x128xf32>
    %cst = arith.constant dense<0.000000e+00> : vector<128x128xf32>
    %2 = tpu.matmul %0, %1, %cst {dimension_numbers = #tpu.dot_dimension_numbers<[1], [0], [0], [1], [0, 0, 1, 1], [], []>} : vector<128x8xf32>, vector<8x128xf32>, vector<128x128xf32> -> vector<128x128xf32>
    %cst_3 = arith.constant 0.000000e+00 : f32
    %3 = vector.broadcast %cst_3 : f32 to vector<128x128xf32>
    %4 = arith.maximumf %2, %3 : vector<128x128xf32>
    %c8 = arith.constant 8 : index
    %c0_4 = arith.constant 0 : index
    %5 = vector.load %arg2[%c8, %c0_4] : memref<144x128xf32, #tpu.memory_space<vmem>>, vector<128x128xf32>
    %6 = arith.truncf %4 : vector<128x128xf32> to vector<128x128xbf16>
    %7 = arith.truncf %5 : vector<128x128xf32> to vector<128x128xbf16>
    %cst_5 = arith.constant dense<0.000000e+00> : vector<128x128xf32>
    %8 = tpu.matmul %6, %7, %cst_5 {dimension_numbers = #tpu.dot_dimension_numbers<[1], [0], [0], [1], [0, 0, 1, 1], [], []>} : vector<128x128xbf16>, vector<128x128xbf16>, vector<128x128xf32> -> vector<128x128xf32>
    %c136 = arith.constant 136 : index
    %c0_6 = arith.constant 0 : index
    %9 = vector.load %arg2[%c136, %c0_6] : memref<144x128xf32, #tpu.memory_space<vmem>>, vector<1x8xf32>
    %10 = vector.extract_strided_slice %8 {offsets = [0, 0], sizes = [128, 8], strides = [1, 1]} : vector<128x128xf32> to vector<128x8xf32>
    %11 = vector.broadcast %9 : vector<1x8xf32> to vector<128x8xf32>
    %12 = arith.addf %10, %11 : vector<128x8xf32>
    %c0_7 = arith.constant 0 : index
    %c0_8 = arith.constant 0 : index
    %13 = vector.load %arg3[%c0_7, %c0_8] : memref<128x8xf32, #tpu.memory_space<vmem>>, vector<128x8xf32>
    tpu.vector_store %arg3[%c0_7, %c0_8], %12 {strides = array<i32>} : memref<128x8xf32, #tpu.memory_space<vmem>>, vector<128x8xf32>,
    return
  }
  func.func @transform_0(%arg0: i32) -> (i32, i32) {
    %c0_i32 = arith.constant 0 : i32
    %c0_i32_0 = arith.constant 0 : i32
    return %arg0, %c0_i32 : i32, i32
  }
  func.func @transform_1(%arg0: i32) -> (i32, i32) {
    %c0_i32 = arith.constant 0 : i32
    %c0_i32_0 = arith.constant 0 : i32
    %c0_i32_1 = arith.constant 0 : i32
    return %c0_i32, %c0_i32_0 : i32, i32
  }
  func.func @transform_2(%arg0: i32) -> (i32, i32) {
    %c0_i32 = arith.constant 0 : i32
    %c0_i32_0 = arith.constant 0 : i32
    return %arg0, %c0_i32 : i32, i32
  }
}

</mosaic_0001>

<llo_original>
// kernel: slp_forward.1
$region0: #{slp_forward.1}
  #allocation0 [shape = 'u32[]', space=smem, size = 0x4, offset = 0x4, fixed_abs, tag = 'smem constant byte address 0x4 - core index']
  #allocation1 [shape = 'u32[144,128]{1,0:T(1,128)}', space=vmem, size = 0x12000, scoped, tag = 'internal scratch']
  %s0 = inlined_call_operand.vmem [shape: f32[256,8], index: 0, kind: input, shape index: {}]
  %s1 = inlined_call_operand.vmem [shape: f32[144,128], index: 1, kind: input, shape index: {}]
  %s2 = inlined_call_operand.vmem [shape: f32[256,8], index: 2, kind: output, shape index: {}]
  %s3 = sld [smem:[#allocation0]]
  $region41: #{slp_forward.1} parent=0
    _
  %s5 = ssub.s32 1, %s3
  %s6 = scalar_select 0, %s5, %s3
  loop: start=0, step=1, limit=4
  $region2: #{slp_forward.1} parent=0 // loop_pre_header
    _
  $region3: #{slp_forward.1} parent=0 // loop_header
    %s8 = sphi 0, %s12
    %p9 = scmp.ge.s32.totalorder %s8, 4
    %s18 = sphi 0, %s20
    %s21 = sphi 0, %s18
    %s22 = sphi 0, %s21
    %s38 = sphi 0, %s22
    %s42 = sphi 0, %s42
    %s44 = sphi 0, %s42
    %s45 = sphi 0, %s44
    %s59 = sphi 0, %s45
    %s65 = sphi 0, %s67
    %s68 = sphi 0, %s65
    %s69 = sphi 0, %s68
    %s85 = sphi 0, %s69
  $region4: #{slp_forward.1} parent=0 // loop_header_branch
    %11 = sbr.rel (%p9) target = $region8
  $region5: #{slp_forward.1} parent=0 // loop_body
    %s13 = ssub.s32 %s8, 1
    %s14 = ssub.s32 %s8, 2
    %s15 = sadd.s32 %s8, 1
    %s16 = ssub.s32 %s8, %s15
    %p17 = scmp.eq.s32.totalorder %s16, 0
    %s19 = sadd.s32 %s18, 1
    %s20 = scalar_select %p17, %s18, %s19
    %p23 = pneg %p17
    %p24 = scmp.eq.s32.totalorder %s8, 1
    %p25 = por %p23, %p24
    %p26 = scmp.ne.s32.totalorder %s18, %s21
    %p27 = scmp.eq.s32.totalorder %s8, 0
    %p28 = por %p26, %p27
    %p29 = scmp.ne.s32.totalorder %s18, %s21
    %p30 = scmp.eq.s32.totalorder %s13, 1
    %p31 = por %p29, %p30
    %p32 = scmp.ne.s32.totalorder %s21, %s22
    %p33 = scmp.eq.s32.totalorder %s13, 0
    %p34 = por %p32, %p33
    %p35 = scmp.ne.s32.totalorder %s21, %s22
    %p36 = scmp.eq.s32.totalorder %s14, 1
    %p37 = por %p35, %p36
    %p39 = scmp.ne.s32.totalorder %s22, %s38
    %p40 = scmp.eq.s32.totalorder %s14, 0
    %p41 = por %p39, %p40
    %s43 = sadd.s32 %s42, 1
    %p46 = scmp.eq.s32.totalorder %s8, 1
    %p47 = scmp.ne.s32.totalorder %s42, %s44
    %p48 = scmp.eq.s32.totalorder %s8, 0
    %p49 = por %p47, %p48
    %p50 = scmp.ne.s32.totalorder %s42, %s44
    %p51 = scmp.eq.s32.totalorder %s13, 1
    %p52 = por %p50, %p51
    %p53 = scmp.ne.s32.totalorder %s44, %s45
    %p54 = scmp.eq.s32.totalorder %s13, 0
    %p55 = por %p53, %p54
    %p56 = scmp.ne.s32.totalorder %s44, %s45
    %p57 = scmp.eq.s32.totalorder %s14, 1
    %p58 = por %p56, %p57
    %p60 = scmp.ne.s32.totalorder %s45, %s59
    %p61 = scmp.eq.s32.totalorder %s14, 0
    %p62 = por %p60, %p61
    %s63 = ssub.s32 %s8, %s15
    %p64 = scmp.eq.s32.totalorder %s63, 0
    %s66 = sadd.s32 %s65, 1
    %s67 = scalar_select %p64, %s65, %s66
    %p70 = pneg %p64
    %p71 = scmp.eq.s32.totalorder %s8, 1
    %p72 = por %p70, %p71
    %p73 = scmp.ne.s32.totalorder %s65, %s68
    %p74 = scmp.eq.s32.totalorder %s8, 0
    %p75 = por %p73, %p74
    %p76 = scmp.ne.s32.totalorder %s65, %s68
    %p77 = scmp.eq.s32.totalorder %s13, 1
    %p78 = por %p76, %p77
    %p79 = scmp.ne.s32.totalorder %s68, %s69
    %p80 = scmp.eq.s32.totalorder %s13, 0
    %p81 = por %p79, %p80
    %p82 = scmp.ne.s32.totalorder %s68, %s69
    %p83 = scmp.eq.s32.totalorder %s14, 1
    %p84 = por %p82, %p83
    %p86 = scmp.ne.s32.totalorder %s69, %s85
    %p87 = scmp.eq.s32.totalorder %s14, 0
    %p88 = por %p86, %p87
    %p89 = scmp.le.s32.totalorder 1, %s8
    %p90 = scmp.lt.s32.totalorder %s8, 3
    %p91 = pnand %p89, %p90
    %p92 = pneg %p91
    // Predicated region
    $region9: #{slp_forward.1} parent=5 // pred_check
      _
    $region10: #{slp_forward.1} parent=5 // pred_check_branch
      %94 = sbr.rel (%p91) target = $region12
    $region11: #{slp_forward.1} parent=5 // pred_region
      %s95 = ssub.s32 %s8, 1
      // Predicated region
      $region13: #{slp_forward.1} parent=11 // pred_check
        %p96 = pneg %p55
      $region14: #{slp_forward.1} parent=11 // pred_check_branch
        %98 = sbr.rel (%p96) target = $region16
      $region15: #{slp_forward.1} parent=11 // pred_region
        _
      $region16: #{slp_forward.1} parent=11 // pred_fallthru
        _
    $region12: #{slp_forward.1} parent=5 // pred_fallthru
      _
    %p99 = scmp.lt.s32.totalorder %s8, 2
    // Predicated region
    $region17: #{slp_forward.1} parent=5 // pred_check
      %p100 = pneg %p99
    $region18: #{slp_forward.1} parent=5 // pred_check_branch
      %102 = sbr.rel (%p100) target = $region20
    $region19: #{slp_forward.1} parent=5 // pred_region
      // Predicated region
      $region21: #{slp_forward.1} parent=19 // pred_check
        %p103 = pneg %p28
      $region22: #{slp_forward.1} parent=19 // pred_check_branch
        %105 = sbr.rel (%p103) target = $region24
      $region23: #{slp_forward.1} parent=19 // pred_region
        %s106 = smul.u32 16, %s8
        %p107 = scmp.lt.s32.totalorder %s106, 31
        %s108 = scalar_select %p107, %s106, 31
        %s109 = smul.addr %s108, 8
        %s110 = scalar_lea.vmem %s0, %s109
        %s111 = smul.u32 16, %s8
      $region24: #{slp_forward.1} parent=19 // pred_fallthru
        _
    $region20: #{slp_forward.1} parent=5 // pred_fallthru
      _
    %p112 = scmp.le.s32.totalorder 1, %s8
    %p113 = scmp.lt.s32.totalorder %s8, 3
    %p114 = pnand %p112, %p113
    %p115 = pneg %p114
    // Predicated region
    $region25: #{slp_forward.1} parent=5 // pred_check
      _
    $region26: #{slp_forward.1} parent=5 // pred_check_branch
      %117 = sbr.rel (%p114) target = $region28
    $region27: #{slp_forward.1} parent=5 // pred_region
      %s118 = ssub.s32 %s8, 1
      %s119 = smul.u32 16, %s13
      %p120 = scmp.lt.s32.totalorder %s119, 31
      %s121 = scalar_select %p120, %s119, 31
      %s122 = smul.addr %s121, 8
      %s123 = scalar_lea.vmem %s0, %s122
      %p124 = pneg %p34
      %p125 = pneg %p31
      %p126 = pneg %p55
      %p127 = pneg %p52
      %p128 = pneg %p81
      %p129 = pneg %p78
      %s130 = smul.u32 16, %s13
      %p131 = scmp.lt.s32.totalorder %s130, 31
      %s132 = scalar_select %p131, %s130, 31
      %s133 = smul.addr %s132, 8
      %s134 = scalar_lea.vmem %s2, %s133
      %s135 = smul.u32 16, %s13
      %p136 = scmp.lt.s32.totalorder %s135, 31
      %s137 = scalar_select %p136, %s135, 31
      %s138 = smul.addr %s137, 8
      %s139 = scalar_lea.vmem %s0, %s138
      %s140 = smul.u32 16, %s13
      %s141 = smul.u32 16, %s13
      %p142 = scmp.lt.s32.totalorder %s141, 31
      %s143 = scalar_select %p142, %s141, 31
      %s144 = smul.addr %s143, 8
      %s145 = scalar_lea.vmem %s2, %s144
      %s146 = smul.u32 16, %s13
      %v148 = vld [vmem:[%s139] sm:$0xff]
      %v149 = vld [vmem:[%s139 + $0x8] sm:$0xff]
      %v150 = vld [vmem:[%s139 + $0x10] sm:$0xff]
      %v151 = vld [vmem:[%s139 + $0x18] sm:$0xff]
      %v152 = vld [vmem:[%s139 + $0x20] sm:$0xff]
      %v153 = vld [vmem:[%s139 + $0x28] sm:$0xff]
      %v154 = vld [vmem:[%s139 + $0x30] sm:$0xff]
      %v155 = vld [vmem:[%s139 + $0x38] sm:$0xff]
      %v156 = vld [vmem:[%s139 + $0x40] sm:$0xff]
      %v157 = vld [vmem:[%s139 + $0x48] sm:$0xff]
      %v158 = vld [vmem:[%s139 + $0x50] sm:$0xff]
      %v159 = vld [vmem:[%s139 + $0x58] sm:$0xff]
      %v160 = vld [vmem:[%s139 + $0x60] sm:$0xff]
      %v161 = vld [vmem:[%s139 + $0x68] sm:$0xff]
      %v162 = vld [vmem:[%s139 + $0x70] sm:$0xff]
      %v163 = vld [vmem:[%s139 + $0x78] sm:$0xff]
      %v164 = vld [vmem:[%s1] sm:$0xff]
      %vm165 = vcmask 64512
      %v167 = vsel %vm165, %v148, 0
      %v170 = vsel %vm165, %v149, 0
      %v173 = vsel %vm165, %v150, 0
      %v176 = vsel %vm165, %v151, 0
      %v179 = vsel %vm165, %v152, 0
      %v182 = vsel %vm165, %v153, 0
      %v185 = vsel %vm165, %v154, 0
      %v188 = vsel %vm165, %v155, 0
      %v191 = vsel %vm165, %v156, 0
      %v194 = vsel %vm165, %v157, 0
      %v197 = vsel %vm165, %v158, 0
      %v200 = vsel %vm165, %v159, 0
      %v203 = vsel %vm165, %v160, 0
      %v206 = vsel %vm165, %v161, 0
      %v209 = vsel %vm165, %v162, 0
      %v212 = vsel %vm165, %v163, 0
      %214 = vmatprep.subr.mxu0 0.0
      %215 = vmatpush1.msra.mxu0 %v164
      %216 = vmatprep.subr.mxu0 0.0
      %217 = vmatpush1.msra.mxu0 0.0
      %218 = vmatprep.subr.mxu0 0.0
      %219 = vmatpush1.msra.mxu0 0.0
      %220 = vmatprep.subr.mxu0 0.0
      %221 = vmatpush1.msra.mxu0 0.0
      %222 = vmatprep.subr.mxu0 0.0
      %223 = vmatpush1.msra.mxu0 0.0
      %224 = vmatprep.subr.mxu0 0.0
      %225 = vmatpush1.msra.mxu0 0.0
      %226 = vmatprep.subr.mxu0 0.0
      %227 = vmatpush1.msra.mxu0 0.0
      %228 = vmatprep.subr.mxu0 0.0
      %229 = vmatpush1.msra.mxu0 0.0
      %230 = vmatprep.subr.mxu0 0.0
      %231 = vmatpush1.msra.mxu0 0.0
      %232 = vmatprep.subr.mxu0 0.0
      %233 = vmatpush1.msra.mxu0 0.0
      %234 = vmatprep.subr.mxu0 0.0
      %235 = vmatpush1.msra.mxu0 0.0
      %236 = vmatprep.subr.mxu0 0.0
      %237 = vmatpush1.msra.mxu0 0.0
      %238 = vmatprep.subr.mxu0 0.0
      %239 = vmatpush1.msra.mxu0 0.0
      %240 = vmatprep.subr.mxu0 0.0
      %241 = vmatpush1.msra.mxu0 0.0
      %242 = vmatprep.subr.mxu0 0.0
      %243 = vmatpush1.msra.mxu0 0.0
      %244 = vmatprep.subr.mxu0 0.0
      %245 = vmatpush1.msra.mxu0 0.0
      %246 = vmatprep.subr.mxu0 0.0
      %247 = vmatpush1.msra.mxu0 0.0
      %248 = vmatprep.subr.mxu0 0.0
      %249 = vmatpush1.msra.mxu0 0.0
      %250 = vmatprep.subr.mxu0 0.0
      %251 = vmatpush1.msra.mxu0 0.0
      %252 = vmatprep.subr.mxu0 0.0
      %253 = vmatpush1.msra.mxu0 0.0
      %254 = vmatprep.subr.mxu0 0.0
      %255 = vmatpush1.msra.mxu0 0.0
      %256 = vmatprep.subr.mxu0 0.0
      %257 = vmatpush1.msra.mxu0 0.0
      %258 = vmatprep.subr.mxu0 0.0
      %259 = vmatpush1.msra.mxu0 0.0
      %260 = vmatprep.subr.mxu0 0.0
      %261 = vmatpush1.msra.mxu0 0.0
      %262 = vmatprep.subr.mxu0 0.0
      %263 = vmatpush1.msra.mxu0 0.0
      %264 = vmatprep.subr.mxu0 0.0
      %265 = vmatpush1.msra.mxu0 0.0
      %266 = vmatprep.subr.mxu0 0.0
      %267 = vmatpush1.msra.mxu0 0.0
      %268 = vmatprep.subr.mxu0 0.0
      %269 = vmatpush1.msra.mxu0 0.0
      %270 = vmatprep.subr.mxu0 0.0
      %271 = vmatpush1.msra.mxu0 0.0
      %272 = vmatprep.subr.mxu0 0.0
      %273 = vmatpush1.msra.mxu0 0.0
      %274 = vmatprep.subr.mxu0 0.0
      %275 = vmatpush1.msra.mxu0 0.0
      %276 = vmatprep.subr.mxu0 0.0
      %277 = vmatpush1.msra.mxu0 0.0
      %278 = vmatprep.mubr.f32.mxu0 0.0
      %279 = vmatmul.mubr.f32.gmra.mrb[0].mxu0 %v167
      %v280 = vpop.f32.mrb[0].mxu0
      %v281 = vadd.f32 0.0, %v280
      %v282 = vpop.f32.mrb[0].mxu0
      %283 = vmatprep.mubr.f32.mxu0 0.0
      %284 = vmatmul.mubr.f32.gmra.mrb[0].mxu0 %v170
      %v285 = vpop.f32.mrb[0].mxu0
      %v286 = vadd.f32 0.0, %v285
      %v287 = vpop.f32.mrb[0].mxu0
      %288 = vmatprep.mubr.f32.mxu0 0.0
      %289 = vmatmul.mubr.f32.gmra.mrb[0].mxu0 %v173
      %v290 = vpop.f32.mrb[0].mxu0
      %v291 = vadd.f32 0.0, %v290
      %v292 = vpop.f32.mrb[0].mxu0
      %293 = vmatprep.mubr.f32.mxu0 0.0
      %294 = vmatmul.mubr.f32.gmra.mrb[0].mxu0 %v176
      %v295 = vpop.f32.mrb[0].mxu0
      %v296 = vadd.f32 0.0, %v295
      %v297 = vpop.f32.mrb[0].mxu0
      %298 = vmatprep.mubr.f32.mxu0 0.0
      %299 = vmatmul.mubr.f32.gmra.mrb[0].mxu0 %v179
      %v300 = vpop.f32.mrb[0].mxu0
      %v301 = vadd.f32 0.0, %v300
      %v302 = vpop.f32.mrb[0].mxu0
      %303 = vmatprep.mubr.f32.mxu0 0.0
      %304 = vmatmul.mubr.f32.gmra.mrb[0].mxu0 %v182
      %v305 = vpop.f32.mrb[0].mxu0
      %v306 = vadd.f32 0.0, %v305
      %v307 = vpop.f32.mrb[0].mxu0
      %308 = vmatprep.mubr.f32.mxu0 0.0
      %309 = vmatmul.mubr.f32.gmra.mrb[0].mxu0 %v185
      %v310 = vpop.f32.mrb[0].mxu0
      %v311 = vadd.f32 0.0, %v310
      %v312 = vpop.f32.mrb[0].mxu0
      %313 = vmatprep.mubr.f32.mxu0 0.0
      %314 = vmatmul.mubr.f32.gmra.mrb[0].mxu0 %v188
      %v315 = vpop.f32.mrb[0].mxu0
      %v316 = vadd.f32 0.0, %v315
      %v317 = vpop.f32.mrb[0].mxu0
      %318 = vmatprep.mubr.f32.mxu0 0.0
      %319 = vmatmul.mubr.f32.gmra.mrb[0].mxu0 %v191
      %v320 = vpop.f32.mrb[0].mxu0
      %v321 = vadd.f32 0.0, %v320
      %v322 = vpop.f32.mrb[0].mxu0
      %323 = vmatprep.mubr.f32.mxu0 0.0
      %324 = vmatmul.mubr.f32.gmra.mrb[0].mxu0 %v194
      %v325 = vpop.f32.mrb[0].mxu0
      %v326 = vadd.f32 0.0, %v325
      %v327 = vpop.f32.mrb[0].mxu0
      %328 = vmatprep.mubr.f32.mxu0 0.0
      %329 = vmatmul.mubr.f32.gmra.mrb[0].mxu0 %v197
      %v330 = vpop.f32.mrb[0].mxu0
      %v331 = vadd.f32 0.0, %v330
      %v332 = vpop.f32.mrb[0].mxu0
      %333 = vmatprep.mubr.f32.mxu0 0.0
      %334 = vmatmul.mubr.f32.gmra.mrb[0].mxu0 %v200
      %v335 = vpop.f32.mrb[0].mxu0
      %v336 = vadd.f32 0.0, %v335
      %v337 = vpop.f32.mrb[0].mxu0
      %338 = vmatprep.mubr.f32.mxu0 0.0
      %339 = vmatmul.mubr.f32.gmra.mrb[0].mxu0 %v203
      %v340 = vpop.f32.mrb[0].mxu0
      %v341 = vadd.f32 0.0, %v340
      %v342 = vpop.f32.mrb[0].mxu0
      %343 = vmatprep.mubr.f32.mxu0 0.0
      %344 = vmatmul.mubr.f32.gmra.mrb[0].mxu0 %v206
      %v345 = vpop.f32.mrb[0].mxu0
      %v346 = vadd.f32 0.0, %v345
      %v347 = vpop.f32.mrb[0].mxu0
      %348 = vmatprep.mubr.f32.mxu0 0.0
      %349 = vmatmul.mubr.f32.gmra.mrb[0].mxu0 %v209
      %v350 = vpop.f32.mrb[0].mxu0
      %v351 = vadd.f32 0.0, %v350
      %v352 = vpop.f32.mrb[0].mxu0
      %353 = vmatprep.mubr.f32.mxu0 0.0
      %354 = vmatmul.mubr.f32.gmra.mrb[0].mxu0 %v212
      %v355 = vpop.f32.mrb[0].mxu0
      %v356 = vadd.f32 0.0, %v355
      %v357 = vpop.f32.mrb[0].mxu0
      %358 = vdwg.mxu0
      %v359 = vmax.f32 %v281, 0.0
      %v360 = vmax.f32 %v286, 0.0
      %v361 = vmax.f32 %v291, 0.0
      %v362 = vmax.f32 %v296, 0.0
      %v363 = vmax.f32 %v301, 0.0
      %v364 = vmax.f32 %v306, 0.0
      %v365 = vmax.f32 %v311, 0.0
      %v366 = vmax.f32 %v316, 0.0
      %v367 = vmax.f32 %v321, 0.0
      %v368 = vmax.f32 %v326, 0.0
      %v369 = vmax.f32 %v331, 0.0
      %v370 = vmax.f32 %v336, 0.0
      %v371 = vmax.f32 %v341, 0.0
      %v372 = vmax.f32 %v346, 0.0
      %v373 = vmax.f32 %v351, 0.0
      %v374 = vmax.f32 %v356, 0.0
      %v375 = vld [vmem:[%s1 + $0x8] sm:$0xff]
      %v376 = vld [vmem:[%s1 + $0x10] sm:$0xff]
      %v377 = vld [vmem:[%s1 + $0x18] sm:$0xff]
      %v378 = vld [vmem:[%s1 + $0x20] sm:$0xff]
      %v379 = vld [vmem:[%s1 + $0x28] sm:$0xff]
      %v380 = vld [vmem:[%s1 + $0x30] sm:$0xff]
      %v381 = vld [vmem:[%s1 + $0x38] sm:$0xff]
      %v382 = vld [vmem:[%s1 + $0x40] sm:$0xff]
      %v383 = vld [vmem:[%s1 + $0x48] sm:$0xff]
      %v384 = vld [vmem:[%s1 + $0x50] sm:$0xff]
      %v385 = vld [vmem:[%s1 + $0x58] sm:$0xff]
      %v386 = vld [vmem:[%s1 + $0x60] sm:$0xff]
      %v387 = vld [vmem:[%s1 + $0x68] sm:$0xff]
      %v388 = vld [vmem:[%s1 + $0x70] sm:$0xff]
      %v389 = vld [vmem:[%s1 + $0x78] sm:$0xff]
      %v390 = vld [vmem:[%s1 + $0x80] sm:$0xff]
      %v391 = vpack.c.bf16 %v360, %v359
      %v392 = vpack.c.bf16 %v362, %v361
      %v393 = vpack.c.bf16 %v364, %v363
      %v394 = vpack.c.bf16 %v366, %v365
      %v395 = vpack.c.bf16 %v368, %v367
      %v396 = vpack.c.bf16 %v370, %v369
      %v397 = vpack.c.bf16 %v372, %v371
      %v398 = vpack.c.bf16 %v374, %v373
      %v399 = vpack.c.bf16 %v376, %v375
      %v400 = vpack.c.bf16 %v378, %v377
      %v401 = vpack.c.bf16 %v380, %v379
      %v402 = vpack.c.bf16 %v382, %v381
      %v403 = vpack.c.bf16 %v384, %v383
      %v404 = vpack.c.bf16 %v386, %v385
      %v405 = vpack.c.bf16 %v388, %v387
      %v406 = vpack.c.bf16 %v390, %v389
      %407 = vmatprep.subr.bf16.mxu0 0
      %408 = vmatpush1.bf16.msra.mxu0 %v399
      %409 = vmatprep.subr.bf16.mxu0 0
      %410 = vmatpush1.bf16.msra.mxu0 %v400
      %411 = vmatprep.subr.bf16.mxu0 0
      %412 = vmatpush1.bf16.msra.mxu0 %v401
      %413 = vmatprep.subr.bf16.mxu0 0
      %414 = vmatpush1.bf16.msra.mxu0 %v402
      %415 = vmatprep.subr.bf16.mxu0 0
      %416 = vmatpush1.bf16.msra.mxu0 %v403
      %417 = vmatprep.subr.bf16.mxu0 0
      %418 = vmatpush1.bf16.msra.mxu0 %v404
      %419 = vmatprep.subr.bf16.mxu0 0
      %420 = vmatpush1.bf16.msra.mxu0 %v405
      %421 = vmatprep.subr.bf16.mxu0 0
      %422 = vmatpush1.bf16.msra.mxu0 %v406
      %423 = vmatprep.subr.bf16.mxu0 0
      %424 = vmatpush1.bf16.msra.mxu0 0
      %425 = vmatprep.subr.bf16.mxu0 0
      %426 = vmatpush1.bf16.msra.mxu0 0
      %427 = vmatprep.subr.bf16.mxu0 0
      %428 = vmatpush1.bf16.msra.mxu0 0
      %429 = vmatprep.subr.bf16.mxu0 0
      %430 = vmatpush1.bf16.msra.mxu0 0
      %431 = vmatprep.subr.bf16.mxu0 0
      %432 = vmatpush1.bf16.msra.mxu0 0
      %433 = vmatprep.subr.bf16.mxu0 0
      %434 = vmatpush1.bf16.msra.mxu0 0
      %435 = vmatprep.subr.bf16.mxu0 0
      %436 = vmatpush1.bf16.msra.mxu0 0
      %437 = vmatprep.subr.bf16.mxu0 0
      %438 = vmatpush1.bf16.msra.mxu0 0
      %439 = vmatprep.mubr.bf16.mxu0 0
      %440 = vmatmul.mubr.bf16.gmra.mrb[0].mxu0 %v391
      %v441 = vpop.f32.mrb[0].mxu0
      %v442 = vadd.f32 0.0, %v441
      %v443 = vpop.f32.mrb[0].mxu0
      %v444 = vpop.f32.mrb[0].mxu0
      %v445 = vadd.f32 0.0, %v444
      %v446 = vpop.f32.mrb[0].mxu0
      %447 = vmatprep.mubr.bf16.mxu0 0
      %448 = vmatmul.mubr.bf16.gmra.mrb[0].mxu0 %v392
      %v449 = vpop.f32.mrb[0].mxu0
      %v450 = vadd.f32 0.0, %v449
      %v451 = vpop.f32.mrb[0].mxu0
      %v452 = vpop.f32.mrb[0].mxu0
      %v453 = vadd.f32 0.0, %v452
      %v454 = vpop.f32.mrb[0].mxu0
      %455 = vmatprep.mubr.bf16.mxu0 0
      %456 = vmatmul.mubr.bf16.gmra.mrb[0].mxu0 %v393
      %v457 = vpop.f32.mrb[0].mxu0
      %v458 = vadd.f32 0.0, %v457
      %v459 = vpop.f32.mrb[0].mxu0
      %v460 = vpop.f32.mrb[0].mxu0
      %v461 = vadd.f32 0.0, %v460
      %v462 = vpop.f32.mrb[0].mxu0
      %463 = vmatprep.mubr.bf16.mxu0 0
      %464 = vmatmul.mubr.bf16.gmra.mrb[0].mxu0 %v394
      %v465 = vpop.f32.mrb[0].mxu0
      %v466 = vadd.f32 0.0, %v465
      %v467 = vpop.f32.mrb[0].mxu0
      %v468 = vpop.f32.mrb[0].mxu0
      %v469 = vadd.f32 0.0, %v468
      %v470 = vpop.f32.mrb[0].mxu0
      %471 = vmatprep.mubr.bf16.mxu0 0
      %472 = vmatmul.mubr.bf16.gmra.mrb[0].mxu0 %v395
      %v473 = vpop.f32.mrb[0].mxu0
      %v474 = vadd.f32 0.0, %v473
      %v475 = vpop.f32.mrb[0].mxu0
      %v476 = vpop.f32.mrb[0].mxu0
      %v477 = vadd.f32 0.0, %v476
      %v478 = vpop.f32.mrb[0].mxu0
      %479 = vmatprep.mubr.bf16.mxu0 0
      %480 = vmatmul.mubr.bf16.gmra.mrb[0].mxu0 %v396
      %v481 = vpop.f32.mrb[0].mxu0
      %v482 = vadd.f32 0.0, %v481
      %v483 = vpop.f32.mrb[0].mxu0
      %v484 = vpop.f32.mrb[0].mxu0
      %v485 = vadd.f32 0.0, %v484
      %v486 = vpop.f32.mrb[0].mxu0
      %487 = vmatprep.mubr.bf16.mxu0 0
      %488 = vmatmul.mubr.bf16.gmra.mrb[0].mxu0 %v397
      %v489 = vpop.f32.mrb[0].mxu0
      %v490 = vadd.f32 0.0, %v489
      %v491 = vpop.f32.mrb[0].mxu0
      %v492 = vpop.f32.mrb[0].mxu0
      %v493 = vadd.f32 0.0, %v492
      %v494 = vpop.f32.mrb[0].mxu0
      %495 = vmatprep.mubr.bf16.mxu0 0
      %496 = vmatmul.mubr.bf16.gmra.mrb[0].mxu0 %v398
      %v497 = vpop.f32.mrb[0].mxu0
      %v498 = vadd.f32 0.0, %v497
      %v499 = vpop.f32.mrb[0].mxu0
      %v500 = vpop.f32.mrb[0].mxu0
      %v501 = vadd.f32 0.0, %v500
      %v502 = vpop.f32.mrb[0].mxu0
      %503 = vdwg.mxu0
      %v504 = vld [vmem:[%s1 + $0x88] sm:$0x1]
      %v505 = vlaneseq
      %v506 = vshrl.u32 %v505, 7
      %v507 = vsub.s32 0, %v506
      %v508 = vrot.slane %v504, %v507
      %v509 = vadd.f32 %v442, %v508
      %v510 = vadd.f32 %v445, %v508
      %v511 = vadd.f32 %v450, %v508
      %v512 = vadd.f32 %v453, %v508
      %v513 = vadd.f32 %v458, %v508
      %v514 = vadd.f32 %v461, %v508
      %v515 = vadd.f32 %v466, %v508
      %v516 = vadd.f32 %v469, %v508
      %v517 = vadd.f32 %v474, %v508
      %v518 = vadd.f32 %v477, %v508
      %v519 = vadd.f32 %v482, %v508
      %v520 = vadd.f32 %v485, %v508
      %v521 = vadd.f32 %v490, %v508
      %v522 = vadd.f32 %v493, %v508
      %v523 = vadd.f32 %v498, %v508
      %v524 = vadd.f32 %v501, %v508
      %525 = vst.msk [vmem:[%s145] sm:$0xff] %vm165, %v509
      %526 = vst.msk [vmem:[%s145 + $0x8] sm:$0xff] %vm165, %v510
      %527 = vst.msk [vmem:[%s145 + $0x10] sm:$0xff] %vm165, %v511
      %528 = vst.msk [vmem:[%s145 + $0x18] sm:$0xff] %vm165, %v512
      %529 = vst.msk [vmem:[%s145 + $0x20] sm:$0xff] %vm165, %v513
      %530 = vst.msk [vmem:[%s145 + $0x28] sm:$0xff] %vm165, %v514
      %531 = vst.msk [vmem:[%s145 + $0x30] sm:$0xff] %vm165, %v515
      %532 = vst.msk [vmem:[%s145 + $0x38] sm:$0xff] %vm165, %v516
      %533 = vst.msk [vmem:[%s145 + $0x40] sm:$0xff] %vm165, %v517
      %534 = vst.msk [vmem:[%s145 + $0x48] sm:$0xff] %vm165, %v518
      %535 = vst.msk [vmem:[%s145 + $0x50] sm:$0xff] %vm165, %v519
      %536 = vst.msk [vmem:[%s145 + $0x58] sm:$0xff] %vm165, %v520
      %537 = vst.msk [vmem:[%s145 + $0x60] sm:$0xff] %vm165, %v521
      %538 = vst.msk [vmem:[%s145 + $0x68] sm:$0xff] %vm165, %v522
      %539 = vst.msk [vmem:[%s145 + $0x70] sm:$0xff] %vm165, %v523
      %540 = vst.msk [vmem:[%s145 + $0x78] sm:$0xff] %vm165, %v524
      %s541 = smul.u32 16, %s13
      %p542 = scmp.lt.s32.totalorder %s541, 31
      %s543 = scalar_select %p542, %s541, 31
      %s544 = smul.addr %s543, 8
      %s545 = scalar_lea.vmem %s2, %s544
      // Predicated region
      $region29: #{slp_forward.1} parent=27 // pred_check
        %p546 = pneg %p78
      $region30: #{slp_forward.1} parent=27 // pred_check_branch
        %548 = sbr.rel (%p546) target = $region32
      $region31: #{slp_forward.1} parent=27 // pred_region
        %s549 = smul.u32 16, %s13
      $region32: #{slp_forward.1} parent=27 // pred_fallthru
        _
    $region28: #{slp_forward.1} parent=5 // pred_fallthru
      _
    %p550 = scmp.le.s32.totalorder 2, %s8
    // Predicated region
    $region33: #{slp_forward.1} parent=5 // pred_check
      %p551 = pneg %p550
    $region34: #{slp_forward.1} parent=5 // pred_check_branch
      %553 = sbr.rel (%p551) target = $region36
    $region35: #{slp_forward.1} parent=5 // pred_region
      %s554 = ssub.s32 %s8, 2
      // Predicated region
      $region37: #{slp_forward.1} parent=35 // pred_check
        %p555 = pneg %p84
      $region38: #{slp_forward.1} parent=35 // pred_check_branch
        %557 = sbr.rel (%p555) target = $region40
      $region39: #{slp_forward.1} parent=35 // pred_region
        %s558 = smul.u32 16, %s14
        %p559 = scmp.lt.s32.totalorder %s558, 31
        %s560 = scalar_select %p559, %s558, 31
        %s561 = smul.addr %s560, 8
        %s562 = scalar_lea.vmem %s2, %s561
      $region40: #{slp_forward.1} parent=35 // pred_fallthru
        _
    $region36: #{slp_forward.1} parent=5 // pred_fallthru
      _
  $region6: #{slp_forward.1} parent=0 // loop_footer
    %s12 = sadd.s32 1, %s8
  $region7: #{slp_forward.1} parent=0 // loop_footer_branch
    %7 = sbr.rel target = $region3
  $region8: #{slp_forward.1} parent=0 // loop_exit
    _

</llo_original>
